<compile_context>
chip_gen: v7x
topology: tpu7x:2x2x1
jax: 0.10.0
libtpu: 0.0.40
codegen_flags: <defaults>
</compile_context>

<pallas_src>
import functools

import numpy as np
import jax
import jax.numpy as jnp
from jax.experimental import pallas as pl
from jax.experimental.pallas import tpu as pltpu


def _round_up(x, m):
    return ((x + m - 1) // m) * m


# -----------------------------------------------------------------------------
# Kernel 1: fused patch-embed + MoE decode head, tiled over tokens.
#   x      = [p1|p2] @ [W1;W2] + b0                      [TN, C0]
#   gate   = softmax(relu(x Wg1 + bg1) Wg2 + bg2)        [TN, E]
#   h_all  = relu(x We1_cat + be1_cat)                   [TN, E*eh]  (packed experts)
#   y      = (expand(gate) * h_all) We2_stack + gate be2 [TN, C0]
#   out    = y Wc_pad + bc_pad                           [TN, 128]   (lane-dense)
# -----------------------------------------------------------------------------
def dynamoe_fused_kernel(p12_ref, w12_ref, b0_ref,
                         wg1_ref, bg1_ref, wg2_ref, bg2_ref,
                         we1c_ref, be1c_ref, we2s_ref, be2s_ref, gexp_ref,
                         wc_ref, bc_ref, out_ref):
    # Stage 1: dual-modality patch embedding as one K=128 matmul.
    x = (jnp.dot(p12_ref[...], w12_ref[...], preferred_element_type=jnp.float32)
         + b0_ref[...])                                                  # [TN, C0]

    # Stage 2a: gating MLP + softmax over the true expert count (no padding).
    hg = jnp.maximum(
        jnp.dot(x, wg1_ref[...], preferred_element_type=jnp.float32) + bg1_ref[...],
        0.0)
    logits = (jnp.dot(hg, wg2_ref[...], preferred_element_type=jnp.float32)
              + bg2_ref[...])
    logits = logits - jnp.max(logits, axis=-1, keepdims=True)
    eg = jnp.exp(logits)
    gate = eg / jnp.sum(eg, axis=-1, keepdims=True)                      # [TN, E]

    # Stage 2b: all experts packed into one 128-lane matmul pair.
    h_all = jnp.maximum(
        jnp.dot(x, we1c_ref[...], preferred_element_type=jnp.float32) + be1c_ref[...],
        0.0)                                                             # [TN, E*eh]
    gate_exp = jnp.dot(gate, gexp_ref[...],
                       preferred_element_type=jnp.float32)               # [TN, E*eh]
    y = (jnp.dot(gate_exp * h_all, we2s_ref[...],
                 preferred_element_type=jnp.float32)
         + jnp.dot(gate, be2s_ref[...],
                   preferred_element_type=jnp.float32))                  # [TN, C0]

    # Stage 2c: per-pixel classifier, output padded to 128 lanes.
    out_ref[...] = (jnp.dot(y, wc_ref[...], preferred_element_type=jnp.float32)
                    + bc_ref[...])


# -----------------------------------------------------------------------------
# Kernel 2: bilinear upsample (align_corners=False), exact F.interpolate
# semantics: out[b, c] = Ry @ feat[b, c] @ Rx^T.  One batch element per grid
# step; the (small) class loop is unrolled inside the kernel.
# -----------------------------------------------------------------------------
def bilinear_kernel(feat_ref, ry_ref, rxT_ref, out_ref):
    n_classes = feat_ref.shape[1]
    for c in range(n_classes):
        t = jnp.dot(feat_ref[0, c], rxT_ref[...],
                    preferred_element_type=jnp.float32)                  # [Hf, W]
        out_ref[0, c] = jnp.dot(ry_ref[...], t,
                                preferred_element_type=jnp.float32)      # [H, W]


def _bilinear_matrix(out_size, in_size):
    """Interpolation matrix R[out, in] matching F.interpolate(bilinear, align_corners=False)."""
    scale = in_size / out_size
    dst = np.arange(out_size, dtype=np.float64)
    src = (dst + 0.5) * scale - 0.5
    src = np.maximum(src, 0.0)
    i0 = np.minimum(np.floor(src).astype(np.int64), in_size - 1)
    i1 = np.minimum(i0 + 1, in_size - 1)
    l1 = src - i0
    l0 = 1.0 - l1
    r = np.zeros((out_size, in_size), dtype=np.float32)
    r[np.arange(out_size), i0] += l0
    r[np.arange(out_size), i1] += l1
    return r


# -----------------------------------------------------------------------------
# Parameter packing: concat / pad weights into MXU- and lane-friendly shapes.
# -----------------------------------------------------------------------------
def _pack_params(params, classes, lane=128):
    W1, W2 = params["W1"], params["W2"]
    P, C0 = W1.shape
    E, _, eh = params["We1"].shape

    K0 = 2 * P
    K0p = _round_up(K0, lane)
    W12 = jnp.concatenate([W1, W2], axis=0)                      # [2P, C0]
    W12p = jnp.pad(W12, ((0, K0p - K0), (0, 0)))                 # [K0p, C0]

    # Experts packed along the lane axis: [C0, E*eh] / [1, E*eh].
    We1c = jnp.transpose(params["We1"], (1, 0, 2)).reshape(C0, E * eh)
    be1c = jnp.transpose(params["be1"], (1, 0, 2)).reshape(1, E * eh)
    # Second projection stacked along K: [E*eh, C0]; biases as [E, C0].
    We2s = params["We2"].reshape(E * eh, C0)
    be2s = params["be2"].reshape(E, C0)
    # Gate expansion (0/1) matrix: gate [TN,E] @ Gexp -> per-column gate weights.
    Gexp = jnp.asarray(np.kron(np.eye(E, dtype=np.float32),
                               np.ones((1, eh), dtype=np.float32)))      # [E, E*eh]

    Cp = _round_up(classes, lane)
    Wcp = jnp.pad(params["Wc"], ((0, 0), (0, Cp - classes)))     # [C0, Cp]
    bcp = jnp.pad(params["bc"], ((0, 0), (0, Cp - classes)))     # [1, Cp]

    return dict(W12p=W12p, b0=params["b0"],
                Wg1=params["Wg1"], bg1=params["bg1"],
                Wg2=params["Wg2"], bg2=params["bg2"],
                We1c=We1c, be1c=be1c, We2s=We2s, be2s=be2s, Gexp=Gexp,
                Wcp=Wcp, bcp=bcp, K0=K0, K0p=K0p, Cp=Cp)


# -----------------------------------------------------------------------------
# Wrapper: DynaMoE forward.
# -----------------------------------------------------------------------------
def dynamoe_forward(image1, image2, params, *, patch=4, classes=5,
                    token_tile=1024):
    B, Cin, H, W = image1.shape
    Hf, Wf = H // patch, W // patch
    N = B * Hf * Wf
    P = Cin * patch * patch

    def to_patches(img):
        x = img.reshape(B, Cin, Hf, patch, Wf, patch)
        x = jnp.transpose(x, (0, 2, 4, 1, 3, 5))                 # [B, Hf, Wf, Cin, ph, pw]
        return x.reshape(N, P).astype(jnp.float32)

    packed = _pack_params(params, classes)
    K0, K0p, Cp = packed["K0"], packed["K0p"], packed["Cp"]

    # Dual-modality token stream, zero-padded to a 128-aligned contraction dim
    # and to a multiple of the token tile.
    p12 = jnp.concatenate([to_patches(image1), to_patches(image2)], axis=1)  # [N, 2P]
    TN = min(token_tile, _round_up(N, 8))
    Np = _round_up(N, TN)
    p12 = jnp.pad(p12, ((0, Np - N), (0, K0p - K0)))             # [Np, K0p]

    def const_spec(arr):
        return pl.BlockSpec(arr.shape, lambda i: (0,) * arr.ndim)

    # ---- fused stage 1 + 2: patch embedding + MoE decode head (Pallas) ----
    seg_pad = pl.pallas_call(
        dynamoe_fused_kernel,
        out_shape=jax.ShapeDtypeStruct((Np, Cp), jnp.float32),
        grid=(Np // TN,),
        in_specs=[
            pl.BlockSpec((TN, K0p), lambda i: (i, 0)),           # token stream
            const_spec(packed["W12p"]),
            const_spec(packed["b0"]),
            const_spec(packed["Wg1"]),
            const_spec(packed["bg1"]),
            const_spec(packed["Wg2"]),
            const_spec(packed["bg2"]),
            const_spec(packed["We1c"]),
            const_spec(packed["be1c"]),
            const_spec(packed["We2s"]),
            const_spec(packed["be2s"]),
            const_spec(packed["Gexp"]),
            const_spec(packed["Wcp"]),
            const_spec(packed["bcp"]),
        ],
        out_specs=pl.BlockSpec((TN, Cp), lambda i: (i, 0)),
        compiler_params=pltpu.CompilerParams(
            dimension_semantics=("parallel",),
            vmem_limit_bytes=48 * 1024 * 1024),
    )(p12, packed["W12p"], packed["b0"], packed["Wg1"], packed["bg1"],
      packed["Wg2"], packed["bg2"], packed["We1c"], packed["be1c"],
      packed["We2s"], packed["be2s"], packed["Gexp"],
      packed["Wcp"], packed["bcp"])

    # glue: drop token / class padding, tokens -> NCHW low-res logits
    seg = seg_pad[:N, :classes]                                  # [N, classes]
    feat = jnp.transpose(seg.reshape(B, Hf, Wf, classes), (0, 3, 1, 2))  # [B, cls, Hf, Wf]

    # ---- stage 3: bilinear upsample to original size (Pallas) ----
    ry = jnp.asarray(_bilinear_matrix(H, Hf))                    # [H,  Hf]
    rxT = jnp.asarray(_bilinear_matrix(W, Wf).T)                 # [Wf, W]

    out = pl.pallas_call(
        bilinear_kernel,
        out_shape=jax.ShapeDtypeStruct((B, classes, H, W), jnp.float32),
        grid=(B,),
        in_specs=[
            pl.BlockSpec((1, classes, Hf, Wf), lambda b: (b, 0, 0, 0)),
            pl.BlockSpec((H, Hf), lambda b: (0, 0)),
            pl.BlockSpec((Wf, W), lambda b: (0, 0)),
        ],
        out_specs=pl.BlockSpec((1, classes, H, W), lambda b: (b, 0, 0, 0)),
        compiler_params=pltpu.CompilerParams(
            dimension_semantics=("parallel",)),
    )(feat, ry, rxT)

    return out                                                   # NCHW, like PyTorch


def init_params(key, *, in_ch=3, patch=4, embed=32, gate_hidden=16,
                expert_hidden=32, num_experts=4, classes=5):
    P = in_ch * patch * patch
    ks = jax.random.split(key, 8)
    s = 0.05
    return {
        "W1":  s * jax.random.normal(ks[0], (P, embed), jnp.float32),
        "W2":  s * jax.random.normal(ks[1], (P, embed), jnp.float32),
        "b0":  jnp.zeros((1, embed), jnp.float32),
        "Wg1": s * jax.random.normal(ks[2], (embed, gate_hidden), jnp.float32),
        "bg1": jnp.zeros((1, gate_hidden), jnp.float32),
        "Wg2": s * jax.random.normal(ks[3], (gate_hidden, num_experts), jnp.float32),
        "bg2": jnp.zeros((1, num_experts), jnp.float32),
        "We1": s * jax.random.normal(ks[4], (num_experts, embed, expert_hidden), jnp.float32),
        "be1": jnp.zeros((num_experts, 1, expert_hidden), jnp.float32),
        "We2": s * jax.random.normal(ks[5], (num_experts, expert_hidden, embed), jnp.float32),
        "be2": jnp.zeros((num_experts, 1, embed), jnp.float32),
        "Wc":  s * jax.random.normal(ks[6], (embed, classes), jnp.float32),
        "bc":  jnp.zeros((1, classes), jnp.float32),
    }


if __name__ == "__main__":
    key = jax.random.PRNGKey(0)
    k1, k2, kp = jax.random.split(key, 3)

    B, Cin, H, W = 2, 3, 16, 16
    image1 = jax.random.normal(k1, (B, Cin, H, W), jnp.float32)   # NCHW
    image2 = jax.random.normal(k2, (B, Cin, H, W), jnp.float32)   # NCHW

    params = init_params(kp)

    out = dynamoe_forward(image1, image2, params)
    out = jax.block_until_ready(out)

    assert out.shape == (B, 5, H, W), out.shape
    assert bool(jnp.all(jnp.isfinite(out)))
    print("KERNEL_OK")
</pallas_src>

<mosaic_0001>
module attributes {stable_mosaic.version = 11 : i64} {
  func.func @dynamoe_fused_kernel(%arg0: i32, %arg1: memref<32x128xf32, #tpu.memory_space<vmem>>, %arg2: memref<128x32xf32, #tpu.memory_space<vmem>>, %arg3: memref<1x32xf32, #tpu.memory_space<vmem>>, %arg4: memref<32x16xf32, #tpu.memory_space<vmem>>, %arg5: memref<1x16xf32, #tpu.memory_space<vmem>>, %arg6: memref<16x4xf32, #tpu.memory_space<vmem>>, %arg7: memref<1x4xf32, #tpu.memory_space<vmem>>, %arg8: memref<32x128xf32, #tpu.memory_space<vmem>>, %arg9: memref<1x128xf32, #tpu.memory_space<vmem>>, %arg10: memref<128x32xf32, #tpu.memory_space<vmem>>, %arg11: memref<4x32xf32, #tpu.memory_space<vmem>>, %arg12: memref<4x128xf32, #tpu.memory_space<vmem>>, %arg13: memref<32x128xf32, #tpu.memory_space<vmem>>, %arg14: memref<1x128xf32, #tpu.memory_space<vmem>>, %arg15: memref<32x128xf32, #tpu.memory_space<vmem>>) attributes {dimension_semantics = [#tpu.dimension_semantics<parallel>], iteration_bounds = array<i64: 1>, scalar_prefetch = 0 : i64, scratch_operands = 0 : i64, tpu.core_type = #tpu.core_type<tc>, window_params = [{transform_indices = @transform_0, window_bounds = array<i64: 32, 128>}, {pipeline_mode = #tpu.pipeline_mode<synchronous>, transform_indices = @transform_1, window_bounds = array<i64: 128, 32>}, {pipeline_mode = #tpu.pipeline_mode<synchronous>, transform_indices = @transform_2, window_bounds = array<i64: 1, 32>}, {pipeline_mode = #tpu.pipeline_mode<synchronous>, transform_indices = @transform_3, window_bounds = array<i64: 32, 16>}, {pipeline_mode = #tpu.pipeline_mode<synchronous>, transform_indices = @transform_4, window_bounds = array<i64: 1, 16>}, {pipeline_mode = #tpu.pipeline_mode<synchronous>, transform_indices = @transform_5, window_bounds = array<i64: 16, 4>}, {pipeline_mode = #tpu.pipeline_mode<synchronous>, transform_indices = @transform_6, window_bounds = array<i64: 1, 4>}, {pipeline_mode = #tpu.pipeline_mode<synchronous>, transform_indices = @transform_7, window_bounds = array<i64: 32, 128>}, {pipeline_mode = #tpu.pipeline_mode<synchronous>, transform_indices = @transform_8, window_bounds = array<i64: 1, 128>}, {pipeline_mode = #tpu.pipeline_mode<synchronous>, transform_indices = @transform_9, window_bounds = array<i64: 128, 32>}, {pipeline_mode = #tpu.pipeline_mode<synchronous>, transform_indices = @transform_10, window_bounds = array<i64: 4, 32>}, {pipeline_mode = #tpu.pipeline_mode<synchronous>, transform_indices = @transform_11, window_bounds = array<i64: 4, 128>}, {pipeline_mode = #tpu.pipeline_mode<synchronous>, transform_indices = @transform_12, window_bounds = array<i64: 32, 128>}, {pipeline_mode = #tpu.pipeline_mode<synchronous>, transform_indices = @transform_13, window_bounds = array<i64: 1, 128>}, {transform_indices = @transform_14, window_bounds = array<i64: 32, 128>}]} {
    %c0 = arith.constant 0 : index
    %c0_0 = arith.constant 0 : index
    %0 = vector.load %arg1[%c0, %c0_0] : memref<32x128xf32, #tpu.memory_space<vmem>>, vector<32x128xf32>
    %c0_1 = arith.constant 0 : index
    %c0_2 = arith.constant 0 : index
    %1 = vector.load %arg2[%c0_1, %c0_2] : memref<128x32xf32, #tpu.memory_space<vmem>>, vector<128x32xf32>
    %cst = arith.constant dense<0.000000e+00> : vector<32x32xf32>
    %2 = tpu.matmul %0, %1, %cst {dimension_numbers = #tpu.dot_dimension_numbers<[1], [0], [0], [1], [0, 0, 1, 1], [], []>} : vector<32x128xf32>, vector<128x32xf32>, vector<32x32xf32> -> vector<32x32xf32>
    %c0_3 = arith.constant 0 : index
    %c0_4 = arith.constant 0 : index
    %3 = vector.load %arg3[%c0_3, %c0_4] : memref<1x32xf32, #tpu.memory_space<vmem>>, vector<1x32xf32>
    %4 = vector.broadcast %3 : vector<1x32xf32> to vector<32x32xf32>
    %5 = arith.addf %2, %4 : vector<32x32xf32>
    %c0_5 = arith.constant 0 : index
    %c0_6 = arith.constant 0 : index
    %6 = vector.load %arg4[%c0_5, %c0_6] : memref<32x16xf32, #tpu.memory_space<vmem>>, vector<32x16xf32>
    %cst_7 = arith.constant dense<0.000000e+00> : vector<32x16xf32>
    %7 = tpu.matmul %5, %6, %cst_7 {dimension_numbers = #tpu.dot_dimension_numbers<[1], [0], [0], [1], [0, 0, 1, 1], [], []>} : vector<32x32xf32>, vector<32x16xf32>, vector<32x16xf32> -> vector<32x16xf32>
    %c0_8 = arith.constant 0 : index
    %c0_9 = arith.constant 0 : index
    %8 = vector.load %arg5[%c0_8, %c0_9] : memref<1x16xf32, #tpu.memory_space<vmem>>, vector<1x16xf32>
    %9 = vector.broadcast %8 : vector<1x16xf32> to vector<32x16xf32>
    %10 = arith.addf %7, %9 : vector<32x16xf32>
    %cst_10 = arith.constant 0.000000e+00 : f32
    %11 = vector.broadcast %cst_10 : f32 to vector<32x16xf32>
    %12 = arith.maximumf %10, %11 : vector<32x16xf32>
    %c0_11 = arith.constant 0 : index
    %c0_12 = arith.constant 0 : index
    %13 = vector.load %arg6[%c0_11, %c0_12] : memref<16x4xf32, #tpu.memory_space<vmem>>, vector<16x4xf32>
    %cst_13 = arith.constant dense<0.000000e+00> : vector<32x4xf32>
    %14 = tpu.matmul %12, %13, %cst_13 {dimension_numbers = #tpu.dot_dimension_numbers<[1], [0], [0], [1], [0, 0, 1, 1], [], []>} : vector<32x16xf32>, vector<16x4xf32>, vector<32x4xf32> -> vector<32x4xf32>
    %c0_14 = arith.constant 0 : index
    %c0_15 = arith.constant 0 : index
    %15 = vector.load %arg7[%c0_14, %c0_15] : memref<1x4xf32, #tpu.memory_space<vmem>>, vector<1x4xf32>
    %16 = vector.broadcast %15 : vector<1x4xf32> to vector<32x4xf32>
    %17 = arith.addf %14, %16 : vector<32x4xf32>
    %cst_16 = arith.constant dense<0xFF800000> : vector<32xf32>
    %18 = vector.multi_reduction <maximumf>, %17, %cst_16 [1] : vector<32x4xf32> to vector<32xf32>
    %19 = vector.shape_cast %18 : vector<32xf32> to vector<32x1xf32>
    %20 = vector.broadcast %19 : vector<32x1xf32> to vector<32x4xf32>
    %21 = arith.subf %17, %20 : vector<32x4xf32>
    %22 = math.exp %21 : vector<32x4xf32>
    %cst_17 = arith.constant dense<0.000000e+00> : vector<32xf32>
    %23 = vector.multi_reduction <add>, %22, %cst_17 [1] : vector<32x4xf32> to vector<32xf32>
    %24 = vector.shape_cast %23 : vector<32xf32> to vector<32x1xf32>
    %25 = vector.broadcast %24 : vector<32x1xf32> to vector<32x4xf32>
    %26 = arith.divf %22, %25 : vector<32x4xf32>
    %c0_18 = arith.constant 0 : index
    %c0_19 = arith.constant 0 : index
    %27 = vector.load %arg8[%c0_18, %c0_19] : memref<32x128xf32, #tpu.memory_space<vmem>>, vector<32x128xf32>
    %cst_20 = arith.constant dense<0.000000e+00> : vector<32x128xf32>
    %28 = tpu.matmul %5, %27, %cst_20 {dimension_numbers = #tpu.dot_dimension_numbers<[1], [0], [0], [1], [0, 0, 1, 1], [], []>} : vector<32x32xf32>, vector<32x128xf32>, vector<32x128xf32> -> vector<32x128xf32>
    %c0_21 = arith.constant 0 : index
    %c0_22 = arith.constant 0 : index
    %29 = vector.load %arg9[%c0_21, %c0_22] : memref<1x128xf32, #tpu.memory_space<vmem>>, vector<1x128xf32>
    %30 = vector.broadcast %29 : vector<1x128xf32> to vector<32x128xf32>
    %31 = arith.addf %28, %30 : vector<32x128xf32>
    %cst_23 = arith.constant 0.000000e+00 : f32
    %32 = vector.broadcast %cst_23 : f32 to vector<32x128xf32>
    %33 = arith.maximumf %31, %32 : vector<32x128xf32>
    %c0_24 = arith.constant 0 : index
    %c0_25 = arith.constant 0 : index
    %34 = vector.load %arg12[%c0_24, %c0_25] : memref<4x128xf32, #tpu.memory_space<vmem>>, vector<4x128xf32>
    %cst_26 = arith.constant dense<0.000000e+00> : vector<32x128xf32>
    %35 = tpu.matmul %26, %34, %cst_26 {dimension_numbers = #tpu.dot_dimension_numbers<[1], [0], [0], [1], [0, 0, 1, 1], [], []>} : vector<32x4xf32>, vector<4x128xf32>, vector<32x128xf32> -> vector<32x128xf32>
    %36 = arith.mulf %35, %33 : vector<32x128xf32>
    %c0_27 = arith.constant 0 : index
    %c0_28 = arith.constant 0 : index
    %37 = vector.load %arg10[%c0_27, %c0_28] : memref<128x32xf32, #tpu.memory_space<vmem>>, vector<128x32xf32>
    %cst_29 = arith.constant dense<0.000000e+00> : vector<32x32xf32>
    %38 = tpu.matmul %36, %37, %cst_29 {dimension_numbers = #tpu.dot_dimension_numbers<[1], [0], [0], [1], [0, 0, 1, 1], [], []>} : vector<32x128xf32>, vector<128x32xf32>, vector<32x32xf32> -> vector<32x32xf32>
    %c0_30 = arith.constant 0 : index
    %c0_31 = arith.constant 0 : index
    %39 = vector.load %arg11[%c0_30, %c0_31] : memref<4x32xf32, #tpu.memory_space<vmem>>, vector<4x32xf32>
    %cst_32 = arith.constant dense<0.000000e+00> : vector<32x32xf32>
    %40 = tpu.matmul %26, %39, %cst_32 {dimension_numbers = #tpu.dot_dimension_numbers<[1], [0], [0], [1], [0, 0, 1, 1], [], []>} : vector<32x4xf32>, vector<4x32xf32>, vector<32x32xf32> -> vector<32x32xf32>
    %41 = arith.addf %38, %40 : vector<32x32xf32>
    %c0_33 = arith.constant 0 : index
    %c0_34 = arith.constant 0 : index
    %42 = vector.load %arg13[%c0_33, %c0_34] : memref<32x128xf32, #tpu.memory_space<vmem>>, vector<32x128xf32>
    %cst_35 = arith.constant dense<0.000000e+00> : vector<32x128xf32>
    %43 = tpu.matmul %41, %42, %cst_35 {dimension_numbers = #tpu.dot_dimension_numbers<[1], [0], [0], [1], [0, 0, 1, 1], [], []>} : vector<32x32xf32>, vector<32x128xf32>, vector<32x128xf32> -> vector<32x128xf32>
    %c0_36 = arith.constant 0 : index
    %c0_37 = arith.constant 0 : index
    %44 = vector.load %arg14[%c0_36, %c0_37] : memref<1x128xf32, #tpu.memory_space<vmem>>, vector<1x128xf32>
    %45 = vector.broadcast %44 : vector<1x128xf32> to vector<32x128xf32>
    %46 = arith.addf %43, %45 : vector<32x128xf32>
    %c0_38 = arith.constant 0 : index
    %c0_39 = arith.constant 0 : index
    %47 = vector.load %arg15[%c0_38, %c0_39] : memref<32x128xf32, #tpu.memory_space<vmem>>, vector<32x128xf32>
    tpu.vector_store %arg15[%c0_38, %c0_39], %46 {strides = array<i32>} : memref<32x128xf32, #tpu.memory_space<vmem>>, vector<32x128xf32>,
    return
  }
  func.func @transform_0(%arg0: i32) -> (i32, i32) {
    %c0_i32 = arith.constant 0 : i32
    %c0_i32_0 = arith.constant 0 : i32
    return %arg0, %c0_i32 : i32, i32
  }
  func.func @transform_1(%arg0: i32) -> (i32, i32) {
    %c0_i32 = arith.constant 0 : i32
    %c0_i32_0 = arith.constant 0 : i32
    %c0_i32_1 = arith.constant 0 : i32
    return %c0_i32, %c0_i32_0 : i32, i32
  }
  func.func @transform_2(%arg0: i32) -> (i32, i32) {
    %c0_i32 = arith.constant 0 : i32
    %c0_i32_0 = arith.constant 0 : i32
    %c0_i32_1 = arith.constant 0 : i32
    return %c0_i32, %c0_i32_0 : i32, i32
  }
  func.func @transform_3(%arg0: i32) -> (i32, i32) {
    %c0_i32 = arith.constant 0 : i32
    %c0_i32_0 = arith.constant 0 : i32
    %c0_i32_1 = arith.constant 0 : i32
    return %c0_i32, %c0_i32_0 : i32, i32
  }
  func.func @transform_4(%arg0: i32) -> (i32, i32) {
    %c0_i32 = arith.constant 0 : i32
    %c0_i32_0 = arith.constant 0 : i32
    %c0_i32_1 = arith.constant 0 : i32
    return %c0_i32, %c0_i32_0 : i32, i32
  }
  func.func @transform_5(%arg0: i32) -> (i32, i32) {
    %c0_i32 = arith.constant 0 : i32
    %c0_i32_0 = arith.constant 0 : i32
    %c0_i32_1 = arith.constant 0 : i32
    return %c0_i32, %c0_i32_0 : i32, i32
  }
  func.func @transform_6(%arg0: i32) -> (i32, i32) {
    %c0_i32 = arith.constant 0 : i32
    %c0_i32_0 = arith.constant 0 : i32
    %c0_i32_1 = arith.constant 0 : i32
    return %c0_i32, %c0_i32_0 : i32, i32
  }
  func.func @transform_7(%arg0: i32) -> (i32, i32) {
    %c0_i32 = arith.constant 0 : i32
    %c0_i32_0 = arith.constant 0 : i32
    %c0_i32_1 = arith.constant 0 : i32
    return %c0_i32, %c0_i32_0 : i32, i32
  }
  func.func @transform_8(%arg0: i32) -> (i32, i32) {
    %c0_i32 = arith.constant 0 : i32
    %c0_i32_0 = arith.constant 0 : i32
    %c0_i32_1 = arith.constant 0 : i32
    return %c0_i32, %c0_i32_0 : i32, i32
  }
  func.func @transform_9(%arg0: i32) -> (i32, i32) {
    %c0_i32 = arith.constant 0 : i32
    %c0_i32_0 = arith.constant 0 : i32
    %c0_i32_1 = arith.constant 0 : i32
    return %c0_i32, %c0_i32_0 : i32, i32
  }
  func.func @transform_10(%arg0: i32) -> (i32, i32) {
    %c0_i32 = arith.constant 0 : i32
    %c0_i32_0 = arith.constant 0 : i32
    %c0_i32_1 = arith.constant 0 : i32
    return %c0_i32, %c0_i32_0 : i32, i32
  }
  func.func @transform_11(%arg0: i32) -> (i32, i32) {
    %c0_i32 = arith.constant 0 : i32
    %c0_i32_0 = arith.constant 0 : i32
    %c0_i32_1 = arith.constant 0 : i32
    return %c0_i32, %c0_i32_0 : i32, i32
  }
  func.func @transform_12(%arg0: i32) -> (i32, i32) {
    %c0_i32 = arith.constant 0 : i32
    %c0_i32_0 = arith.constant 0 : i32
    %c0_i32_1 = arith.constant 0 : i32
    return %c0_i32, %c0_i32_0 : i32, i32
  }
  func.func @transform_13(%arg0: i32) -> (i32, i32) {
    %c0_i32 = arith.constant 0 : i32
    %c0_i32_0 = arith.constant 0 : i32
    %c0_i32_1 = arith.constant 0 : i32
    return %c0_i32, %c0_i32_0 : i32, i32
  }
  func.func @transform_14(%arg0: i32) -> (i32, i32) {
    %c0_i32 = arith.constant 0 : i32
    %c0_i32_0 = arith.constant 0 : i32
    return %arg0, %c0_i32 : i32, i32
  }
}

</mosaic_0001>

<llo_original>
// kernel: tpu_custom_call.1
$region0: #{tpu_custom_call.1}
  #allocation0 [shape = 'u32[]', space=smem, size = 0x4, offset = 0x4, fixed_abs, tag = 'smem constant byte address 0x4 - core index']
  #allocation1 [shape = 'u32[144,128]{1,0:T(1,128)}', space=vmem, size = 0x12000, scoped, tag = 'internal scratch']
  %s0 = inlined_call_operand.vmem [shape: f32[32,128], index: 0, kind: input, shape index: {}]
  %s1 = inlined_call_operand.vmem [shape: f32[128,32], index: 1, kind: input, shape index: {}]
  %s2 = inlined_call_operand.vmem [shape: f32[1,32], index: 2, kind: input, shape index: {}]
  %s3 = inlined_call_operand.vmem [shape: f32[32,16], index: 3, kind: input, shape index: {}]
  %s4 = inlined_call_operand.vmem [shape: f32[1,16], index: 4, kind: input, shape index: {}]
  %s5 = inlined_call_operand.vmem [shape: f32[16,4], index: 5, kind: input, shape index: {}]
  %s6 = inlined_call_operand.vmem [shape: f32[1,4], index: 6, kind: input, shape index: {}]
  %s7 = inlined_call_operand.vmem [shape: f32[32,128], index: 7, kind: input, shape index: {}]
  %s8 = inlined_call_operand.vmem [shape: f32[1,128], index: 8, kind: input, shape index: {}]
  %s9 = inlined_call_operand.vmem [shape: f32[128,32], index: 9, kind: input, shape index: {}]
  %s10 = inlined_call_operand.vmem [shape: f32[4,32], index: 10, kind: input, shape index: {}]
  %s11 = inlined_call_operand.vmem [shape: f32[4,128], index: 11, kind: input, shape index: {}]
  %s12 = inlined_call_operand.vmem [shape: f32[32,128], index: 12, kind: input, shape index: {}]
  %s13 = inlined_call_operand.vmem [shape: f32[1,128], index: 13, kind: input, shape index: {}]
  %s14 = inlined_call_operand.hbm [shape: f32[32,128], index: 14, kind: output, shape index: {}]
  %s15 = sld [smem:[#allocation0]]
  $region66: #{tpu_custom_call.1} parent=0
    _
  %s17 = ssub.s32 1, %s15
  %s18 = scalar_select 0, %s17, %s15
  $region1: #{tpu_custom_call.1} parent=0
    #allocation2 [shape = 'u8[16384]{0}', space=vmem, size = 0x4000, scoped, tag = 'output window, operand 0, single buffered']
    #allocation3 [shape = 's32[1]{0}', space=sflag, size = 0x4, scoped, tag = 'scoped memory for tpu_custom_call.1']
    %19 = vsyncpa [#allocation3], 0
    // Predicated region
    $region2: #{tpu_custom_call.1} parent=1 // pred_check
      _
    $region3: #{tpu_custom_call.1} parent=1 // pred_check_branch
      %21 = sbr.rel (0) target = $region5
    $region4: #{tpu_custom_call.1} parent=1 // pred_region
      _
    $region5: #{tpu_custom_call.1} parent=1 // pred_fallthru
      _
    // Predicated region
    $region6: #{tpu_custom_call.1} parent=1 // pred_check
      _
    $region7: #{tpu_custom_call.1} parent=1 // pred_check_branch
      %23 = sbr.rel (0) target = $region9
    $region8: #{tpu_custom_call.1} parent=1 // pred_region
      _
    $region9: #{tpu_custom_call.1} parent=1 // pred_fallthru
      _
    // Predicated region
    $region10: #{tpu_custom_call.1} parent=1 // pred_check
      _
    $region11: #{tpu_custom_call.1} parent=1 // pred_check_branch
      %25 = sbr.rel (0) target = $region13
    $region12: #{tpu_custom_call.1} parent=1 // pred_region
      _
    $region13: #{tpu_custom_call.1} parent=1 // pred_fallthru
      _
    // Predicated region
    $region14: #{tpu_custom_call.1} parent=1 // pred_check
      _
    $region15: #{tpu_custom_call.1} parent=1 // pred_check_branch
      %27 = sbr.rel (0) target = $region17
    $region16: #{tpu_custom_call.1} parent=1 // pred_region
      _
    $region17: #{tpu_custom_call.1} parent=1 // pred_fallthru
      _
    // Predicated region
    $region18: #{tpu_custom_call.1} parent=1 // pred_check
      _
    $region19: #{tpu_custom_call.1} parent=1 // pred_check_branch
      %29 = sbr.rel (0) target = $region21
    $region20: #{tpu_custom_call.1} parent=1 // pred_region
      _
    $region21: #{tpu_custom_call.1} parent=1 // pred_fallthru
      _
    // Predicated region
    $region22: #{tpu_custom_call.1} parent=1 // pred_check
      _
    $region23: #{tpu_custom_call.1} parent=1 // pred_check_branch
      %31 = sbr.rel (0) target = $region25
    $region24: #{tpu_custom_call.1} parent=1 // pred_region
      _
    $region25: #{tpu_custom_call.1} parent=1 // pred_fallthru
      _
    // Predicated region
    $region26: #{tpu_custom_call.1} parent=1 // pred_check
      _
    $region27: #{tpu_custom_call.1} parent=1 // pred_check_branch
      %33 = sbr.rel (0) target = $region29
    $region28: #{tpu_custom_call.1} parent=1 // pred_region
      _
    $region29: #{tpu_custom_call.1} parent=1 // pred_fallthru
      _
    // Predicated region
    $region30: #{tpu_custom_call.1} parent=1 // pred_check
      _
    $region31: #{tpu_custom_call.1} parent=1 // pred_check_branch
      %35 = sbr.rel (0) target = $region33
    $region32: #{tpu_custom_call.1} parent=1 // pred_region
      _
    $region33: #{tpu_custom_call.1} parent=1 // pred_fallthru
      _
    // Predicated region
    $region34: #{tpu_custom_call.1} parent=1 // pred_check
      _
    $region35: #{tpu_custom_call.1} parent=1 // pred_check_branch
      %37 = sbr.rel (0) target = $region37
    $region36: #{tpu_custom_call.1} parent=1 // pred_region
      _
    $region37: #{tpu_custom_call.1} parent=1 // pred_fallthru
      _
    // Predicated region
    $region38: #{tpu_custom_call.1} parent=1 // pred_check
      _
    $region39: #{tpu_custom_call.1} parent=1 // pred_check_branch
      %39 = sbr.rel (0) target = $region41
    $region40: #{tpu_custom_call.1} parent=1 // pred_region
      _
    $region41: #{tpu_custom_call.1} parent=1 // pred_fallthru
      _
    // Predicated region
    $region42: #{tpu_custom_call.1} parent=1 // pred_check
      _
    $region43: #{tpu_custom_call.1} parent=1 // pred_check_branch
      %41 = sbr.rel (0) target = $region45
    $region44: #{tpu_custom_call.1} parent=1 // pred_region
      _
    $region45: #{tpu_custom_call.1} parent=1 // pred_fallthru
      _
    // Predicated region
    $region46: #{tpu_custom_call.1} parent=1 // pred_check
      _
    $region47: #{tpu_custom_call.1} parent=1 // pred_check_branch
      %43 = sbr.rel (0) target = $region49
    $region48: #{tpu_custom_call.1} parent=1 // pred_region
      _
    $region49: #{tpu_custom_call.1} parent=1 // pred_fallthru
      _
    // Predicated region
    $region50: #{tpu_custom_call.1} parent=1 // pred_check
      _
    $region51: #{tpu_custom_call.1} parent=1 // pred_check_branch
      %45 = sbr.rel (0) target = $region53
    $region52: #{tpu_custom_call.1} parent=1 // pred_region
      _
    $region53: #{tpu_custom_call.1} parent=1 // pred_fallthru
      _
    // Predicated region
    $region54: #{tpu_custom_call.1} parent=1 // pred_check
      _
    $region55: #{tpu_custom_call.1} parent=1 // pred_check_branch
      %47 = sbr.rel (0) target = $region57
    $region56: #{tpu_custom_call.1} parent=1 // pred_region
      _
    $region57: #{tpu_custom_call.1} parent=1 // pred_fallthru
      _
    %v48 = vld [vmem:[%s0] sm:$0xff]
    %v49 = vld [vmem:[%s0 + $0x8] sm:$0xff]
    %v50 = vld [vmem:[%s0 + $0x10] sm:$0xff]
    %v51 = vld [vmem:[%s0 + $0x18] sm:$0xff]
    %v52 = vld [vmem:[%s1] sm:$0xff]
    %v53 = vld [vmem:[%s1 + $0x8] sm:$0xff]
    %v54 = vld [vmem:[%s1 + $0x10] sm:$0xff]
    %v55 = vld [vmem:[%s1 + $0x18] sm:$0xff]
    %v56 = vld [vmem:[%s1 + $0x20] sm:$0xff]
    %v57 = vld [vmem:[%s1 + $0x28] sm:$0xff]
    %v58 = vld [vmem:[%s1 + $0x30] sm:$0xff]
    %v59 = vld [vmem:[%s1 + $0x38] sm:$0xff]
    %v60 = vld [vmem:[%s1 + $0x40] sm:$0xff]
    %v61 = vld [vmem:[%s1 + $0x48] sm:$0xff]
    %v62 = vld [vmem:[%s1 + $0x50] sm:$0xff]
    %v63 = vld [vmem:[%s1 + $0x58] sm:$0xff]
    %v64 = vld [vmem:[%s1 + $0x60] sm:$0xff]
    %v65 = vld [vmem:[%s1 + $0x68] sm:$0xff]
    %v66 = vld [vmem:[%s1 + $0x70] sm:$0xff]
    %v67 = vld [vmem:[%s1 + $0x78] sm:$0xff]
    %v68 = vld [vmem:[%s2] sm:$0x1]
    %v70 = vlaneseq
    %v71 = vshrl.u32 %v70, 7
    %v72 = vsub.s32 0, %v71
    %v73 = vrot.slane %v68, %v72
    %75 = vmatprep.subr.mxu0 0.0
    %76 = vmatpush1.msra.mxu0 %v52
    %77 = vmatprep.subr.mxu0 0.0
    %78 = vmatpush1.msra.mxu0 %v53
    %79 = vmatprep.subr.mxu0 0.0
    %80 = vmatpush1.msra.mxu0 %v54
    %81 = vmatprep.subr.mxu0 0.0
    %82 = vmatpush1.msra.mxu0 %v55
    %83 = vmatprep.subr.mxu0 0.0
    %84 = vmatpush1.msra.mxu0 %v56
    %85 = vmatprep.subr.mxu0 0.0
    %86 = vmatpush1.msra.mxu0 %v57
    %87 = vmatprep.subr.mxu0 0.0
    %88 = vmatpush1.msra.mxu0 %v58
    %89 = vmatprep.subr.mxu0 0.0
    %90 = vmatpush1.msra.mxu0 %v59
    %91 = vmatprep.subr.mxu0 0.0
    %92 = vmatpush1.msra.mxu0 %v60
    %93 = vmatprep.subr.mxu0 0.0
    %94 = vmatpush1.msra.mxu0 %v61
    %95 = vmatprep.subr.mxu0 0.0
    %96 = vmatpush1.msra.mxu0 %v62
    %97 = vmatprep.subr.mxu0 0.0
    %98 = vmatpush1.msra.mxu0 %v63
    %99 = vmatprep.subr.mxu0 0.0
    %100 = vmatpush1.msra.mxu0 %v64
    %101 = vmatprep.subr.mxu0 0.0
    %102 = vmatpush1.msra.mxu0 %v65
    %103 = vmatprep.subr.mxu0 0.0
    %104 = vmatpush1.msra.mxu0 %v66
    %105 = vmatprep.subr.mxu0 0.0
    %106 = vmatpush1.msra.mxu0 %v67
    %107 = vmatprep.subr.mxu0 0.0
    %108 = vmatpush1.msra.mxu0 0.0
    %109 = vmatprep.subr.mxu0 0.0
    %110 = vmatpush1.msra.mxu0 0.0
    %111 = vmatprep.subr.mxu0 0.0
    %112 = vmatpush1.msra.mxu0 0.0
    %113 = vmatprep.subr.mxu0 0.0
    %114 = vmatpush1.msra.mxu0 0.0
    %115 = vmatprep.subr.mxu0 0.0
    %116 = vmatpush1.msra.mxu0 0.0
    %117 = vmatprep.subr.mxu0 0.0
    %118 = vmatpush1.msra.mxu0 0.0
    %119 = vmatprep.subr.mxu0 0.0
    %120 = vmatpush1.msra.mxu0 0.0
    %121 = vmatprep.subr.mxu0 0.0
    %122 = vmatpush1.msra.mxu0 0.0
    %123 = vmatprep.subr.mxu0 0.0
    %124 = vmatpush1.msra.mxu0 0.0
    %125 = vmatprep.subr.mxu0 0.0
    %126 = vmatpush1.msra.mxu0 0.0
    %127 = vmatprep.subr.mxu0 0.0
    %128 = vmatpush1.msra.mxu0 0.0
    %129 = vmatprep.subr.mxu0 0.0
    %130 = vmatpush1.msra.mxu0 0.0
    %131 = vmatprep.subr.mxu0 0.0
    %132 = vmatpush1.msra.mxu0 0.0
    %133 = vmatprep.subr.mxu0 0.0
    %134 = vmatpush1.msra.mxu0 0.0
    %135 = vmatprep.subr.mxu0 0.0
    %136 = vmatpush1.msra.mxu0 0.0
    %137 = vmatprep.subr.mxu0 0.0
    %138 = vmatpush1.msra.mxu0 0.0
    %139 = vmatprep.mubr.f32.mxu0 0.0
    %140 = vmatmul.mubr.f32.gmra.mrb[0].mxu0 %v48
    %v141 = vpop.f32.mrb[0].mxu0
    %v142 = vadd.f32 %v73, %v141
    %v143 = vpop.f32.mrb[0].mxu0
    %144 = vmatprep.mubr.f32.mxu0 0.0
    %145 = vmatmul.mubr.f32.gmra.mrb[0].mxu0 %v49
    %v146 = vpop.f32.mrb[0].mxu0
    %v147 = vadd.f32 %v73, %v146
    %v148 = vpop.f32.mrb[0].mxu0
    %149 = vmatprep.mubr.f32.mxu0 0.0
    %150 = vmatmul.mubr.f32.gmra.mrb[0].mxu0 %v50
    %v151 = vpop.f32.mrb[0].mxu0
    %v152 = vadd.f32 %v73, %v151
    %v153 = vpop.f32.mrb[0].mxu0
    %154 = vmatprep.mubr.f32.mxu0 0.0
    %155 = vmatmul.mubr.f32.gmra.mrb[0].mxu0 %v51
    %v156 = vpop.f32.mrb[0].mxu0
    %v157 = vadd.f32 %v73, %v156
    %v158 = vpop.f32.mrb[0].mxu0
    %159 = vdwg.mxu0
    %v160 = vld [vmem:[%s3] sm:$0xff]
    %v161 = vld [vmem:[%s3 + $0x8] sm:$0xff]
    %v162 = vld [vmem:[%s3 + $0x10] sm:$0xff]
    %v163 = vld [vmem:[%s3 + $0x18] sm:$0xff]
    %v164 = vld [vmem:[%s4] sm:$0x1]
    %v166 = vlaneseq
    %v167 = vshrl.u32 %v166, 7
    %v168 = vsub.s32 0, %v167
    %v169 = vrot.slane %v164, %v168
    %vm171 = vcmask 261120
    %v173 = vsel %vm171, %v142, 0
    %v176 = vsel %vm171, %v147, 0
    %v179 = vsel %vm171, %v152, 0
    %v182 = vsel %vm171, %v157, 0
    %184 = vmatprep.subr.mxu0 0.0
    %185 = vmatpush1.msra.mxu0 %v160
    %186 = vmatprep.subr.mxu0 0.0
    %187 = vmatpush1.msra.mxu0 %v161
    %188 = vmatprep.subr.mxu0 0.0
    %189 = vmatpush1.msra.mxu0 %v162
    %190 = vmatprep.subr.mxu0 0.0
    %191 = vmatpush1.msra.mxu0 %v163
    %192 = vmatprep.subr.mxu0 0.0
    %193 = vmatpush1.msra.mxu0 0.0
    %194 = vmatprep.subr.mxu0 0.0
    %195 = vmatpush1.msra.mxu0 0.0
    %196 = vmatprep.subr.mxu0 0.0
    %197 = vmatpush1.msra.mxu0 0.0
    %198 = vmatprep.subr.mxu0 0.0
    %199 = vmatpush1.msra.mxu0 0.0
    %200 = vmatprep.subr.mxu0 0.0
    %201 = vmatpush1.msra.mxu0 0.0
    %202 = vmatprep.subr.mxu0 0.0
    %203 = vmatpush1.msra.mxu0 0.0
    %204 = vmatprep.subr.mxu0 0.0
    %205 = vmatpush1.msra.mxu0 0.0
    %206 = vmatprep.subr.mxu0 0.0
    %207 = vmatpush1.msra.mxu0 0.0
    %208 = vmatprep.subr.mxu0 0.0
    %209 = vmatpush1.msra.mxu0 0.0
    %210 = vmatprep.subr.mxu0 0.0
    %211 = vmatpush1.msra.mxu0 0.0
    %212 = vmatprep.subr.mxu0 0.0
    %213 = vmatpush1.msra.mxu0 0.0
    %214 = vmatprep.subr.mxu0 0.0
    %215 = vmatpush1.msra.mxu0 0.0
    %216 = vmatprep.subr.mxu0 0.0
    %217 = vmatpush1.msra.mxu0 0.0
    %218 = vmatprep.subr.mxu0 0.0
    %219 = vmatpush1.msra.mxu0 0.0
    %220 = vmatprep.subr.mxu0 0.0
    %221 = vmatpush1.msra.mxu0 0.0
    %222 = vmatprep.subr.mxu0 0.0
    %223 = vmatpush1.msra.mxu0 0.0
    %224 = vmatprep.subr.mxu0 0.0
    %225 = vmatpush1.msra.mxu0 0.0
    %226 = vmatprep.subr.mxu0 0.0
    %227 = vmatpush1.msra.mxu0 0.0
    %228 = vmatprep.subr.mxu0 0.0
    %229 = vmatpush1.msra.mxu0 0.0
    %230 = vmatprep.subr.mxu0 0.0
    %231 = vmatpush1.msra.mxu0 0.0
    %232 = vmatprep.subr.mxu0 0.0
    %233 = vmatpush1.msra.mxu0 0.0
    %234 = vmatprep.subr.mxu0 0.0
    %235 = vmatpush1.msra.mxu0 0.0
    %236 = vmatprep.subr.mxu0 0.0
    %237 = vmatpush1.msra.mxu0 0.0
    %238 = vmatprep.subr.mxu0 0.0
    %239 = vmatpush1.msra.mxu0 0.0
    %240 = vmatprep.subr.mxu0 0.0
    %241 = vmatpush1.msra.mxu0 0.0
    %242 = vmatprep.subr.mxu0 0.0
    %243 = vmatpush1.msra.mxu0 0.0
    %244 = vmatprep.subr.mxu0 0.0
    %245 = vmatpush1.msra.mxu0 0.0
    %246 = vmatprep.subr.mxu0 0.0
    %247 = vmatpush1.msra.mxu0 0.0
    %248 = vmatprep.mubr.f32.mxu0 0.0
    %249 = vmatmul.mubr.f32.gmra.mrb[0].mxu0 %v173
    %v250 = vpop.f32.mrb[0].mxu0
    %v251 = vadd.f32 %v169, %v250
    %v252 = vpop.f32.mrb[0].mxu0
    %253 = vmatprep.mubr.f32.mxu0 0.0
    %254 = vmatmul.mubr.f32.gmra.mrb[0].mxu0 %v176
    %v255 = vpop.f32.mrb[0].mxu0
    %v256 = vadd.f32 %v169, %v255
    %v257 = vpop.f32.mrb[0].mxu0
    %258 = vmatprep.mubr.f32.mxu0 0.0
    %259 = vmatmul.mubr.f32.gmra.mrb[0].mxu0 %v179
    %v260 = vpop.f32.mrb[0].mxu0
    %v261 = vadd.f32 %v169, %v260
    %v262 = vpop.f32.mrb[0].mxu0
    %263 = vmatprep.mubr.f32.mxu0 0.0
    %264 = vmatmul.mubr.f32.gmra.mrb[0].mxu0 %v182
    %v265 = vpop.f32.mrb[0].mxu0
    %v266 = vadd.f32 %v169, %v265
    %v267 = vpop.f32.mrb[0].mxu0
    %268 = vdwg.mxu0
    %v269 = vmax.f32 %v251, 0.0
    %v270 = vmax.f32 %v256, 0.0
    %v271 = vmax.f32 %v261, 0.0
    %v272 = vmax.f32 %v266, 0.0
    %v273 = vld [vmem:[%s5] sm:$0xff]
    %v274 = vld [vmem:[%s5 + $0x8] sm:$0xff]
    %v275 = vld [vmem:[%s6] sm:$0x1]
    %v277 = vlaneseq
    %v278 = vshrl.u32 %v277, 7
    %v279 = vsub.s32 0, %v278
    %v280 = vrot.slane %v275, %v279
    %vm282 = vcmask 130048
    %v284 = vsel %vm282, %v269, 0
    %v287 = vsel %vm282, %v270, 0
    %v290 = vsel %vm282, %v271, 0
    %v293 = vsel %vm282, %v272, 0
    %295 = vmatprep.subr.mxu0 0.0
    %296 = vmatpush1.msra.mxu0 %v273
    %297 = vmatprep.subr.mxu0 0.0
    %298 = vmatpush1.msra.mxu0 %v274
    %299 = vmatprep.subr.mxu0 0.0
    %300 = vmatpush1.msra.mxu0 0.0
    %301 = vmatprep.subr.mxu0 0.0
    %302 = vmatpush1.msra.mxu0 0.0
    %303 = vmatprep.subr.mxu0 0.0
    %304 = vmatpush1.msra.mxu0 0.0
    %305 = vmatprep.subr.mxu0 0.0
    %306 = vmatpush1.msra.mxu0 0.0
    %307 = vmatprep.subr.mxu0 0.0
    %308 = vmatpush1.msra.mxu0 0.0
    %309 = vmatprep.subr.mxu0 0.0
    %310 = vmatpush1.msra.mxu0 0.0
    %311 = vmatprep.subr.mxu0 0.0
    %312 = vmatpush1.msra.mxu0 0.0
    %313 = vmatprep.subr.mxu0 0.0
    %314 = vmatpush1.msra.mxu0 0.0
    %315 = vmatprep.subr.mxu0 0.0
    %316 = vmatpush1.msra.mxu0 0.0
    %317 = vmatprep.subr.mxu0 0.0
    %318 = vmatpush1.msra.mxu0 0.0
    %319 = vmatprep.subr.mxu0 0.0
    %320 = vmatpush1.msra.mxu0 0.0
    %321 = vmatprep.subr.mxu0 0.0
    %322 = vmatpush1.msra.mxu0 0.0
    %323 = vmatprep.subr.mxu0 0.0
    %324 = vmatpush1.msra.mxu0 0.0
    %325 = vmatprep.subr.mxu0 0.0
    %326 = vmatpush1.msra.mxu0 0.0
    %327 = vmatprep.subr.mxu0 0.0
    %328 = vmatpush1.msra.mxu0 0.0
    %329 = vmatprep.subr.mxu0 0.0
    %330 = vmatpush1.msra.mxu0 0.0
    %331 = vmatprep.subr.mxu0 0.0
    %332 = vmatpush1.msra.mxu0 0.0
    %333 = vmatprep.subr.mxu0 0.0
    %334 = vmatpush1.msra.mxu0 0.0
    %335 = vmatprep.subr.mxu0 0.0
    %336 = vmatpush1.msra.mxu0 0.0
    %337 = vmatprep.subr.mxu0 0.0
    %338 = vmatpush1.msra.mxu0 0.0
    %339 = vmatprep.subr.mxu0 0.0
    %340 = vmatpush1.msra.mxu0 0.0
    %341 = vmatprep.subr.mxu0 0.0
    %342 = vmatpush1.msra.mxu0 0.0
    %343 = vmatprep.subr.mxu0 0.0
    %344 = vmatpush1.msra.mxu0 0.0
    %345 = vmatprep.subr.mxu0 0.0
    %346 = vmatpush1.msra.mxu0 0.0
    %347 = vmatprep.subr.mxu0 0.0
    %348 = vmatpush1.msra.mxu0 0.0
    %349 = vmatprep.subr.mxu0 0.0
    %350 = vmatpush1.msra.mxu0 0.0
    %351 = vmatprep.subr.mxu0 0.0
    %352 = vmatpush1.msra.mxu0 0.0
    %353 = vmatprep.subr.mxu0 0.0
    %354 = vmatpush1.msra.mxu0 0.0
    %355 = vmatprep.subr.mxu0 0.0
    %356 = vmatpush1.msra.mxu0 0.0
    %357 = vmatprep.subr.mxu0 0.0
    %358 = vmatpush1.msra.mxu0 0.0
    %359 = vmatprep.mubr.f32.mxu0 0.0
    %360 = vmatmul.mubr.f32.gmra.mrb[0].mxu0 %v284
    %v361 = vpop.f32.mrb[0].mxu0
    %v362 = vadd.f32 %v280, %v361
    %v363 = vpop.f32.mrb[0].mxu0
    %364 = vmatprep.mubr.f32.mxu0 0.0
    %365 = vmatmul.mubr.f32.gmra.mrb[0].mxu0 %v287
    %v366 = vpop.f32.mrb[0].mxu0
    %v367 = vadd.f32 %v280, %v366
    %v368 = vpop.f32.mrb[0].mxu0
    %369 = vmatprep.mubr.f32.mxu0 0.0
    %370 = vmatmul.mubr.f32.gmra.mrb[0].mxu0 %v290
    %v371 = vpop.f32.mrb[0].mxu0
    %v372 = vadd.f32 %v280, %v371
    %v373 = vpop.f32.mrb[0].mxu0
    %374 = vmatprep.mubr.f32.mxu0 0.0
    %375 = vmatmul.mubr.f32.gmra.mrb[0].mxu0 %v293
    %v376 = vpop.f32.mrb[0].mxu0
    %v377 = vadd.f32 %v280, %v376
    %v378 = vpop.f32.mrb[0].mxu0
    %379 = vdwg.mxu0
    %vm380 = vcmask 31744
    %v381 = vsel %vm380, %v362, -inf
    %382 = vmax.xlane.f32.xlu0 %v381
    %v383 = vpop.xlane.xlu0 %382
    %v384 = vsel %vm380, %v367, -inf
    %385 = vmax.xlane.f32.xlu0 %v384
    %v386 = vpop.xlane.xlu0 %385
    %v387 = vsel %vm380, %v372, -inf
    %388 = vmax.xlane.f32.xlu0 %v387
    %v389 = vpop.xlane.xlu0 %388
    %v390 = vsel %vm380, %v377, -inf
    %391 = vmax.xlane.f32.xlu0 %v390
    %v392 = vpop.xlane.xlu0 %391
    %v393 = vsub.f32 %v362, %v383
    %v394 = vsub.f32 %v367, %v386
    %v395 = vsub.f32 %v372, %v389
    %v396 = vsub.f32 %v377, %v392
    %v397 = vmul.f32 %v393, 1.442695
    %v398 = vpow.pop %v397
    %v399 = vmul.f32 %v394, 1.442695
    %v400 = vpow.pop %v399
    %v401 = vmul.f32 %v395, 1.442695
    %v402 = vpow.pop %v401
    %v403 = vmul.f32 %v396, 1.442695
    %v404 = vpow.pop %v403
    %v405 = vsel %vm380, %v398, 0.0
    %406 = vadd.xlane.f32.xlu0 %v405
    %v407 = vpop.xlane.xlu0 %406
    %v408 = vsel %vm380, %v400, 0.0
    %409 = vadd.xlane.f32.xlu0 %v408
    %v410 = vpop.xlane.xlu0 %409
    %v411 = vsel %vm380, %v402, 0.0
    %412 = vadd.xlane.f32.xlu0 %v411
    %v413 = vpop.xlane.xlu0 %412
    %v414 = vsel %vm380, %v404, 0.0
    %415 = vadd.xlane.f32.xlu0 %v414
    %v416 = vpop.xlane.xlu0 %415
    %v417 = vrcp.pop %v407
    %v418 = vmul.f32 %v398, %v417
    %v419 = vrcp.pop %v410
    %v420 = vmul.f32 %v400, %v419
    %v421 = vrcp.pop %v413
    %v422 = vmul.f32 %v402, %v421
    %v423 = vrcp.pop %v416
    %v424 = vmul.f32 %v404, %v423
    %v425 = vld [vmem:[%s7] sm:$0xff]
    %v426 = vld [vmem:[%s7 + $0x8] sm:$0xff]
    %v427 = vld [vmem:[%s7 + $0x10] sm:$0xff]
    %v428 = vld [vmem:[%s7 + $0x18] sm:$0xff]
    %v429 = vld [vmem:[%s8] sm:$0x1]
    %v431 = vlaneseq
    %v432 = vshrl.u32 %v431, 7
    %v433 = vsub.s32 0, %v432
    %v434 = vrot.slane %v429, %v433
    %436 = vmatprep.subr.mxu0 0.0
    %437 = vmatpush1.msra.mxu0 %v425
    %438 = vmatprep.subr.mxu0 0.0
    %439 = vmatpush1.msra.mxu0 %v426
    %440 = vmatprep.subr.mxu0 0.0
    %441 = vmatpush1.msra.mxu0 %v427
    %442 = vmatprep.subr.mxu0 0.0
    %443 = vmatpush1.msra.mxu0 %v428
    %444 = vmatprep.subr.mxu0 0.0
    %445 = vmatpush1.msra.mxu0 0.0
    %446 = vmatprep.subr.mxu0 0.0
    %447 = vmatpush1.msra.mxu0 0.0
    %448 = vmatprep.subr.mxu0 0.0
    %449 = vmatpush1.msra.mxu0 0.0
    %450 = vmatprep.subr.mxu0 0.0
    %451 = vmatpush1.msra.mxu0 0.0
    %452 = vmatprep.subr.mxu0 0.0
    %453 = vmatpush1.msra.mxu0 0.0
    %454 = vmatprep.subr.mxu0 0.0
    %455 = vmatpush1.msra.mxu0 0.0
    %456 = vmatprep.subr.mxu0 0.0
    %457 = vmatpush1.msra.mxu0 0.0
    %458 = vmatprep.subr.mxu0 0.0
    %459 = vmatpush1.msra.mxu0 0.0
    %460 = vmatprep.subr.mxu0 0.0
    %461 = vmatpush1.msra.mxu0 0.0
    %462 = vmatprep.subr.mxu0 0.0
    %463 = vmatpush1.msra.mxu0 0.0
    %464 = vmatprep.subr.mxu0 0.0
    %465 = vmatpush1.msra.mxu0 0.0
    %466 = vmatprep.subr.mxu0 0.0
    %467 = vmatpush1.msra.mxu0 0.0
    %468 = vmatprep.subr.mxu0 0.0
    %469 = vmatpush1.msra.mxu0 0.0
    %470 = vmatprep.subr.mxu0 0.0
    %471 = vmatpush1.msra.mxu0 0.0
    %472 = vmatprep.subr.mxu0 0.0
    %473 = vmatpush1.msra.mxu0 0.0
    %474 = vmatprep.subr.mxu0 0.0
    %475 = vmatpush1.msra.mxu0 0.0
    %476 = vmatprep.subr.mxu0 0.0
    %477 = vmatpush1.msra.mxu0 0.0
    %478 = vmatprep.subr.mxu0 0.0
    %479 = vmatpush1.msra.mxu0 0.0
    %480 = vmatprep.subr.mxu0 0.0
    %481 = vmatpush1.msra.mxu0 0.0
    %482 = vmatprep.subr.mxu0 0.0
    %483 = vmatpush1.msra.mxu0 0.0
    %484 = vmatprep.subr.mxu0 0.0
    %485 = vmatpush1.msra.mxu0 0.0
    %486 = vmatprep.subr.mxu0 0.0
    %487 = vmatpush1.msra.mxu0 0.0
    %488 = vmatprep.subr.mxu0 0.0
    %489 = vmatpush1.msra.mxu0 0.0
    %490 = vmatprep.subr.mxu0 0.0
    %491 = vmatpush1.msra.mxu0 0.0
    %492 = vmatprep.subr.mxu0 0.0
    %493 = vmatpush1.msra.mxu0 0.0
    %494 = vmatprep.subr.mxu0 0.0
    %495 = vmatpush1.msra.mxu0 0.0
    %496 = vmatprep.subr.mxu0 0.0
    %497 = vmatpush1.msra.mxu0 0.0
    %498 = vmatprep.subr.mxu0 0.0
    %499 = vmatpush1.msra.mxu0 0.0
    %500 = vmatprep.mubr.f32.mxu0 0.0
    %501 = vmatmul.mubr.f32.gmra.mrb[0].mxu0 %v173
    %v502 = vpop.f32.mrb[0].mxu0
    %v503 = vadd.f32 %v434, %v502
    %v504 = vpop.f32.mrb[0].mxu0
    %505 = vmatprep.mubr.f32.mxu0 0.0
    %506 = vmatmul.mubr.f32.gmra.mrb[0].mxu0 %v176
    %v507 = vpop.f32.mrb[0].mxu0
    %v508 = vadd.f32 %v434, %v507
    %v509 = vpop.f32.mrb[0].mxu0
    %510 = vmatprep.mubr.f32.mxu0 0.0
    %511 = vmatmul.mubr.f32.gmra.mrb[0].mxu0 %v179
    %v512 = vpop.f32.mrb[0].mxu0
    %v513 = vadd.f32 %v434, %v512
    %v514 = vpop.f32.mrb[0].mxu0
    %515 = vmatprep.mubr.f32.mxu0 0.0
    %516 = vmatmul.mubr.f32.gmra.mrb[0].mxu0 %v182
    %v517 = vpop.f32.mrb[0].mxu0
    %v518 = vadd.f32 %v434, %v517
    %v519 = vpop.f32.mrb[0].mxu0
    %520 = vdwg.mxu0
    %v521 = vmax.f32 %v503, 0.0
    %v522 = vmax.f32 %v508, 0.0
    %v523 = vmax.f32 %v513, 0.0
    %v524 = vmax.f32 %v518, 0.0
    %v525 = vld [vmem:[%s11] sm:$0xf]
    %v527 = vsel %vm380, %v418, 0
    %v530 = vsel %vm380, %v420, 0
    %v533 = vsel %vm380, %v422, 0
    %v536 = vsel %vm380, %v424, 0
    %vm538 = vcmask 1043456
    %v540 = vsel %vm538, %v525, 0
    %542 = vmatprep.subr.mxu0 0.0
    %543 = vmatpush1.msra.mxu0 %v540
    %544 = vmatprep.subr.mxu0 0.0
    %545 = vmatpush1.msra.mxu0 0.0
    %546 = vmatprep.subr.mxu0 0.0
    %547 = vmatpush1.msra.mxu0 0.0
    %548 = vmatprep.subr.mxu0 0.0
    %549 = vmatpush1.msra.mxu0 0.0
    %550 = vmatprep.subr.mxu0 0.0
    %551 = vmatpush1.msra.mxu0 0.0
    %552 = vmatprep.subr.mxu0 0.0
    %553 = vmatpush1.msra.mxu0 0.0
    %554 = vmatprep.subr.mxu0 0.0
    %555 = vmatpush1.msra.mxu0 0.0
    %556 = vmatprep.subr.mxu0 0.0
    %557 = vmatpush1.msra.mxu0 0.0
    %558 = vmatprep.subr.mxu0 0.0
    %559 = vmatpush1.msra.mxu0 0.0
    %560 = vmatprep.subr.mxu0 0.0
    %561 = vmatpush1.msra.mxu0 0.0
    %562 = vmatprep.subr.mxu0 0.0
    %563 = vmatpush1.msra.mxu0 0.0
    %564 = vmatprep.subr.mxu0 0.0
    %565 = vmatpush1.msra.mxu0 0.0
    %566 = vmatprep.subr.mxu0 0.0
    %567 = vmatpush1.msra.mxu0 0.0
    %568 = vmatprep.subr.mxu0 0.0
    %569 = vmatpush1.msra.mxu0 0.0
    %570 = vmatprep.subr.mxu0 0.0
    %571 = vmatpush1.msra.mxu0 0.0
    %572 = vmatprep.subr.mxu0 0.0
    %573 = vmatpush1.msra.mxu0 0.0
    %574 = vmatprep.subr.mxu0 0.0
    %575 = vmatpush1.msra.mxu0 0.0
    %576 = vmatprep.subr.mxu0 0.0
    %577 = vmatpush1.msra.mxu0 0.0
    %578 = vmatprep.subr.mxu0 0.0
    %579 = vmatpush1.msra.mxu0 0.0
    %580 = vmatprep.subr.mxu0 0.0
    %581 = vmatpush1.msra.mxu0 0.0
    %582 = vmatprep.subr.mxu0 0.0
    %583 = vmatpush1.msra.mxu0 0.0
    %584 = vmatprep.subr.mxu0 0.0
    %585 = vmatpush1.msra.mxu0 0.0
    %586 = vmatprep.subr.mxu0 0.0
    %587 = vmatpush1.msra.mxu0 0.0
    %588 = vmatprep.subr.mxu0 0.0
    %589 = vmatpush1.msra.mxu0 0.0
    %590 = vmatprep.subr.mxu0 0.0
    %591 = vmatpush1.msra.mxu0 0.0
    %592 = vmatprep.subr.mxu0 0.0
    %593 = vmatpush1.msra.mxu0 0.0
    %594 = vmatprep.subr.mxu0 0.0
    %595 = vmatpush1.msra.mxu0 0.0
    %596 = vmatprep.subr.mxu0 0.0
    %597 = vmatpush1.msra.mxu0 0.0
    %598 = vmatprep.subr.mxu0 0.0
    %599 = vmatpush1.msra.mxu0 0.0
    %600 = vmatprep.subr.mxu0 0.0
    %601 = vmatpush1.msra.mxu0 0.0
    %602 = vmatprep.subr.mxu0 0.0
    %603 = vmatpush1.msra.mxu0 0.0
    %604 = vmatprep.subr.mxu0 0.0
    %605 = vmatpush1.msra.mxu0 0.0
    %606 = vmatprep.mubr.f32.mxu0 0.0
    %607 = vmatmul.mubr.f32.gmra.mrb[0].mxu0 %v527
    %v608 = vpop.f32.mrb[0].mxu0
    %v609 = vadd.f32 0.0, %v608
    %v610 = vpop.f32.mrb[0].mxu0
    %611 = vmatprep.mubr.f32.mxu0 0.0
    %612 = vmatmul.mubr.f32.gmra.mrb[0].mxu0 %v530
    %v613 = vpop.f32.mrb[0].mxu0
    %v614 = vadd.f32 0.0, %v613
    %v615 = vpop.f32.mrb[0].mxu0
    %616 = vmatprep.mubr.f32.mxu0 0.0
    %617 = vmatmul.mubr.f32.gmra.mrb[0].mxu0 %v533
    %v618 = vpop.f32.mrb[0].mxu0
    %v619 = vadd.f32 0.0, %v618
    %v620 = vpop.f32.mrb[0].mxu0
    %621 = vmatprep.mubr.f32.mxu0 0.0
    %622 = vmatmul.mubr.f32.gmra.mrb[0].mxu0 %v536
    %v623 = vpop.f32.mrb[0].mxu0
    %v624 = vadd.f32 0.0, %v623
    %v625 = vpop.f32.mrb[0].mxu0
    %626 = vdwg.mxu0
    %v627 = vmul.f32 %v609, %v521
    %v628 = vmul.f32 %v614, %v522
    %v629 = vmul.f32 %v619, %v523
    %v630 = vmul.f32 %v624, %v524
    %v631 = vld [vmem:[%s9] sm:$0xff]
    %v632 = vld [vmem:[%s9 + $0x8] sm:$0xff]
    %v633 = vld [vmem:[%s9 + $0x10] sm:$0xff]
    %v634 = vld [vmem:[%s9 + $0x18] sm:$0xff]
    %v635 = vld [vmem:[%s9 + $0x20] sm:$0xff]
    %v636 = vld [vmem:[%s9 + $0x28] sm:$0xff]
    %v637 = vld [vmem:[%s9 + $0x30] sm:$0xff]
    %v638 = vld [vmem:[%s9 + $0x38] sm:$0xff]
    %v639 = vld [vmem:[%s9 + $0x40] sm:$0xff]
    %v640 = vld [vmem:[%s9 + $0x48] sm:$0xff]
    %v641 = vld [vmem:[%s9 + $0x50] sm:$0xff]
    %v642 = vld [vmem:[%s9 + $0x58] sm:$0xff]
    %v643 = vld [vmem:[%s9 + $0x60] sm:$0xff]
    %v644 = vld [vmem:[%s9 + $0x68] sm:$0xff]
    %v645 = vld [vmem:[%s9 + $0x70] sm:$0xff]
    %v646 = vld [vmem:[%s9 + $0x78] sm:$0xff]
    %v647 = vld [vmem:[%s10] sm:$0xf]
    %v649 = vsel %vm538, %v647, 0
    %651 = vmatprep.subr.mxu0 0.0
    %652 = vmatpush1.msra.mxu0 %v649
    %653 = vmatprep.subr.mxu0 0.0
    %654 = vmatpush1.msra.mxu0 0.0
    %655 = vmatprep.subr.mxu0 0.0
    %656 = vmatpush1.msra.mxu0 0.0
    %657 = vmatprep.subr.mxu0 0.0
    %658 = vmatpush1.msra.mxu0 0.0
    %659 = vmatprep.subr.mxu0 0.0
    %660 = vmatpush1.msra.mxu0 0.0
    %661 = vmatprep.subr.mxu0 0.0
    %662 = vmatpush1.msra.mxu0 0.0
    %663 = vmatprep.subr.mxu0 0.0
    %664 = vmatpush1.msra.mxu0 0.0
    %665 = vmatprep.subr.mxu0 0.0
    %666 = vmatpush1.msra.mxu0 0.0
    %667 = vmatprep.subr.mxu0 0.0
    %668 = vmatpush1.msra.mxu0 0.0
    %669 = vmatprep.subr.mxu0 0.0
    %670 = vmatpush1.msra.mxu0 0.0
    %671 = vmatprep.subr.mxu0 0.0
    %672 = vmatpush1.msra.mxu0 0.0
    %673 = vmatprep.subr.mxu0 0.0
    %674 = vmatpush1.msra.mxu0 0.0
    %675 = vmatprep.subr.mxu0 0.0
    %676 = vmatpush1.msra.mxu0 0.0
    %677 = vmatprep.subr.mxu0 0.0
    %678 = vmatpush1.msra.mxu0 0.0
    %679 = vmatprep.subr.mxu0 0.0
    %680 = vmatpush1.msra.mxu0 0.0
    %681 = vmatprep.subr.mxu0 0.0
    %682 = vmatpush1.msra.mxu0 0.0
    %683 = vmatprep.subr.mxu0 0.0
    %684 = vmatpush1.msra.mxu0 0.0
    %685 = vmatprep.subr.mxu0 0.0
    %686 = vmatpush1.msra.mxu0 0.0
    %687 = vmatprep.subr.mxu0 0.0
    %688 = vmatpush1.msra.mxu0 0.0
    %689 = vmatprep.subr.mxu0 0.0
    %690 = vmatpush1.msra.mxu0 0.0
    %691 = vmatprep.subr.mxu0 0.0
    %692 = vmatpush1.msra.mxu0 0.0
    %693 = vmatprep.subr.mxu0 0.0
    %694 = vmatpush1.msra.mxu0 0.0
    %695 = vmatprep.subr.mxu0 0.0
    %696 = vmatpush1.msra.mxu0 0.0
    %697 = vmatprep.subr.mxu0 0.0
    %698 = vmatpush1.msra.mxu0 0.0
    %699 = vmatprep.subr.mxu0 0.0
    %700 = vmatpush1.msra.mxu0 0.0
    %701 = vmatprep.subr.mxu0 0.0
    %702 = vmatpush1.msra.mxu0 0.0
    %703 = vmatprep.subr.mxu0 0.0
    %704 = vmatpush1.msra.mxu0 0.0
    %705 = vmatprep.subr.mxu0 0.0
    %706 = vmatpush1.msra.mxu0 0.0
    %707 = vmatprep.subr.mxu0 0.0
    %708 = vmatpush1.msra.mxu0 0.0
    %709 = vmatprep.subr.mxu0 0.0
    %710 = vmatpush1.msra.mxu0 0.0
    %711 = vmatprep.subr.mxu0 0.0
    %712 = vmatpush1.msra.mxu0 0.0
    %713 = vmatprep.subr.mxu0 0.0
    %714 = vmatpush1.msra.mxu0 0.0
    %715 = vmatprep.mubr.f32.mxu0 0.0
    %716 = vmatmul.mubr.f32.gmra.mrb[0].mxu0 %v527
    %v717 = vpop.f32.mrb[0].mxu0
    %v718 = vadd.f32 0.0, %v717
    %v719 = vpop.f32.mrb[0].mxu0
    %720 = vmatprep.mubr.f32.mxu0 0.0
    %721 = vmatmul.mubr.f32.gmra.mrb[0].mxu0 %v530
    %v722 = vpop.f32.mrb[0].mxu0
    %v723 = vadd.f32 0.0, %v722
    %v724 = vpop.f32.mrb[0].mxu0
    %725 = vmatprep.mubr.f32.mxu0 0.0
    %726 = vmatmul.mubr.f32.gmra.mrb[0].mxu0 %v533
    %v727 = vpop.f32.mrb[0].mxu0
    %v728 = vadd.f32 0.0, %v727
    %v729 = vpop.f32.mrb[0].mxu0
    %730 = vmatprep.mubr.f32.mxu0 0.0
    %731 = vmatmul.mubr.f32.gmra.mrb[0].mxu0 %v536
    %v732 = vpop.f32.mrb[0].mxu0
    %v733 = vadd.f32 0.0, %v732
    %v734 = vpop.f32.mrb[0].mxu0
    %735 = vdwg.mxu0
    %736 = vmatprep.subr.mxu0 0.0
    %737 = vmatpush1.msra.mxu0 %v631
    %738 = vmatprep.subr.mxu0 0.0
    %739 = vmatpush1.msra.mxu0 %v632
    %740 = vmatprep.subr.mxu0 0.0
    %741 = vmatpush1.msra.mxu0 %v633
    %742 = vmatprep.subr.mxu0 0.0
    %743 = vmatpush1.msra.mxu0 %v634
    %744 = vmatprep.subr.mxu0 0.0
    %745 = vmatpush1.msra.mxu0 %v635
    %746 = vmatprep.subr.mxu0 0.0
    %747 = vmatpush1.msra.mxu0 %v636
    %748 = vmatprep.subr.mxu0 0.0
    %749 = vmatpush1.msra.mxu0 %v637
    %750 = vmatprep.subr.mxu0 0.0
    %751 = vmatpush1.msra.mxu0 %v638
    %752 = vmatprep.subr.mxu0 0.0
    %753 = vmatpush1.msra.mxu0 %v639
    %754 = vmatprep.subr.mxu0 0.0
    %755 = vmatpush1.msra.mxu0 %v640
    %756 = vmatprep.subr.mxu0 0.0
    %757 = vmatpush1.msra.mxu0 %v641
    %758 = vmatprep.subr.mxu0 0.0
    %759 = vmatpush1.msra.mxu0 %v642
    %760 = vmatprep.subr.mxu0 0.0
    %761 = vmatpush1.msra.mxu0 %v643
    %762 = vmatprep.subr.mxu0 0.0
    %763 = vmatpush1.msra.mxu0 %v644
    %764 = vmatprep.subr.mxu0 0.0
    %765 = vmatpush1.msra.mxu0 %v645
    %766 = vmatprep.subr.mxu0 0.0
    %767 = vmatpush1.msra.mxu0 %v646
    %768 = vmatprep.subr.mxu0 0.0
    %769 = vmatpush1.msra.mxu0 0.0
    %770 = vmatprep.subr.mxu0 0.0
    %771 = vmatpush1.msra.mxu0 0.0
    %772 = vmatprep.subr.mxu0 0.0
    %773 = vmatpush1.msra.mxu0 0.0
    %774 = vmatprep.subr.mxu0 0.0
    %775 = vmatpush1.msra.mxu0 0.0
    %776 = vmatprep.subr.mxu0 0.0
    %777 = vmatpush1.msra.mxu0 0.0
    %778 = vmatprep.subr.mxu0 0.0
    %779 = vmatpush1.msra.mxu0 0.0
    %780 = vmatprep.subr.mxu0 0.0
    %781 = vmatpush1.msra.mxu0 0.0
    %782 = vmatprep.subr.mxu0 0.0
    %783 = vmatpush1.msra.mxu0 0.0
    %784 = vmatprep.subr.mxu0 0.0
    %785 = vmatpush1.msra.mxu0 0.0
    %786 = vmatprep.subr.mxu0 0.0
    %787 = vmatpush1.msra.mxu0 0.0
    %788 = vmatprep.subr.mxu0 0.0
    %789 = vmatpush1.msra.mxu0 0.0
    %790 = vmatprep.subr.mxu0 0.0
    %791 = vmatpush1.msra.mxu0 0.0
    %792 = vmatprep.subr.mxu0 0.0
    %793 = vmatpush1.msra.mxu0 0.0
    %794 = vmatprep.subr.mxu0 0.0
    %795 = vmatpush1.msra.mxu0 0.0
    %796 = vmatprep.subr.mxu0 0.0
    %797 = vmatpush1.msra.mxu0 0.0
    %798 = vmatprep.subr.mxu0 0.0
    %799 = vmatpush1.msra.mxu0 0.0
    %800 = vmatprep.mubr.f32.mxu0 0.0
    %801 = vmatmul.mubr.f32.gmra.mrb[0].mxu0 %v627
    %v802 = vpop.f32.mrb[0].mxu0
    %v803 = vadd.f32 %v718, %v802
    %v804 = vpop.f32.mrb[0].mxu0
    %805 = vmatprep.mubr.f32.mxu0 0.0
    %806 = vmatmul.mubr.f32.gmra.mrb[0].mxu0 %v628
    %v807 = vpop.f32.mrb[0].mxu0
    %v808 = vadd.f32 %v723, %v807
    %v809 = vpop.f32.mrb[0].mxu0
    %810 = vmatprep.mubr.f32.mxu0 0.0
    %811 = vmatmul.mubr.f32.gmra.mrb[0].mxu0 %v629
    %v812 = vpop.f32.mrb[0].mxu0
    %v813 = vadd.f32 %v728, %v812
    %v814 = vpop.f32.mrb[0].mxu0
    %815 = vmatprep.mubr.f32.mxu0 0.0
    %816 = vmatmul.mubr.f32.gmra.mrb[0].mxu0 %v630
    %v817 = vpop.f32.mrb[0].mxu0
    %v818 = vadd.f32 %v733, %v817
    %v819 = vpop.f32.mrb[0].mxu0
    %820 = vdwg.mxu0
    %v821 = vld [vmem:[%s12] sm:$0xff]
    %v822 = vld [vmem:[%s12 + $0x8] sm:$0xff]
    %v823 = vld [vmem:[%s12 + $0x10] sm:$0xff]
    %v824 = vld [vmem:[%s12 + $0x18] sm:$0xff]
    %v825 = vld [vmem:[%s13] sm:$0x1]
    %v827 = vlaneseq
    %v828 = vshrl.u32 %v827, 7
    %v829 = vsub.s32 0, %v828
    %v830 = vrot.slane %v825, %v829
    %v833 = vsel %vm171, %v803, 0
    %v836 = vsel %vm171, %v808, 0
    %v839 = vsel %vm171, %v813, 0
    %v842 = vsel %vm171, %v818, 0
    %844 = vmatprep.subr.mxu0 0.0
    %845 = vmatpush1.msra.mxu0 %v821
    %846 = vmatprep.subr.mxu0 0.0
    %847 = vmatpush1.msra.mxu0 %v822
    %848 = vmatprep.subr.mxu0 0.0
    %849 = vmatpush1.msra.mxu0 %v823
    %850 = vmatprep.subr.mxu0 0.0
    %851 = vmatpush1.msra.mxu0 %v824
    %852 = vmatprep.subr.mxu0 0.0
    %853 = vmatpush1.msra.mxu0 0.0
    %854 = vmatprep.subr.mxu0 0.0
    %855 = vmatpush1.msra.mxu0 0.0
    %856 = vmatprep.subr.mxu0 0.0
    %857 = vmatpush1.msra.mxu0 0.0
    %858 = vmatprep.subr.mxu0 0.0
    %859 = vmatpush1.msra.mxu0 0.0
    %860 = vmatprep.subr.mxu0 0.0
    %861 = vmatpush1.msra.mxu0 0.0
    %862 = vmatprep.subr.mxu0 0.0
    %863 = vmatpush1.msra.mxu0 0.0
    %864 = vmatprep.subr.mxu0 0.0
    %865 = vmatpush1.msra.mxu0 0.0
    %866 = vmatprep.subr.mxu0 0.0
    %867 = vmatpush1.msra.mxu0 0.0
    %868 = vmatprep.subr.mxu0 0.0
    %869 = vmatpush1.msra.mxu0 0.0
    %870 = vmatprep.subr.mxu0 0.0
    %871 = vmatpush1.msra.mxu0 0.0
    %872 = vmatprep.subr.mxu0 0.0
    %873 = vmatpush1.msra.mxu0 0.0
    %874 = vmatprep.subr.mxu0 0.0
    %875 = vmatpush1.msra.mxu0 0.0
    %876 = vmatprep.subr.mxu0 0.0
    %877 = vmatpush1.msra.mxu0 0.0
    %878 = vmatprep.subr.mxu0 0.0
    %879 = vmatpush1.msra.mxu0 0.0
    %880 = vmatprep.subr.mxu0 0.0
    %881 = vmatpush1.msra.mxu0 0.0
    %882 = vmatprep.subr.mxu0 0.0
    %883 = vmatpush1.msra.mxu0 0.0
    %884 = vmatprep.subr.mxu0 0.0
    %885 = vmatpush1.msra.mxu0 0.0
    %886 = vmatprep.subr.mxu0 0.0
    %887 = vmatpush1.msra.mxu0 0.0
    %888 = vmatprep.subr.mxu0 0.0
    %889 = vmatpush1.msra.mxu0 0.0
    %890 = vmatprep.subr.mxu0 0.0
    %891 = vmatpush1.msra.mxu0 0.0
    %892 = vmatprep.subr.mxu0 0.0
    %893 = vmatpush1.msra.mxu0 0.0
    %894 = vmatprep.subr.mxu0 0.0
    %895 = vmatpush1.msra.mxu0 0.0
    %896 = vmatprep.subr.mxu0 0.0
    %897 = vmatpush1.msra.mxu0 0.0
    %898 = vmatprep.subr.mxu0 0.0
    %899 = vmatpush1.msra.mxu0 0.0
    %900 = vmatprep.subr.mxu0 0.0
    %901 = vmatpush1.msra.mxu0 0.0
    %902 = vmatprep.subr.mxu0 0.0
    %903 = vmatpush1.msra.mxu0 0.0
    %904 = vmatprep.subr.mxu0 0.0
    %905 = vmatpush1.msra.mxu0 0.0
    %906 = vmatprep.subr.mxu0 0.0
    %907 = vmatpush1.msra.mxu0 0.0
    %908 = vmatprep.mubr.f32.mxu0 0.0
    %909 = vmatmul.mubr.f32.gmra.mrb[0].mxu0 %v833
    %v910 = vpop.f32.mrb[0].mxu0
    %v911 = vadd.f32 %v830, %v910
    %v912 = vpop.f32.mrb[0].mxu0
    %913 = vmatprep.mubr.f32.mxu0 0.0
    %914 = vmatmul.mubr.f32.gmra.mrb[0].mxu0 %v836
    %v915 = vpop.f32.mrb[0].mxu0
    %v916 = vadd.f32 %v830, %v915
    %v917 = vpop.f32.mrb[0].mxu0
    %918 = vmatprep.mubr.f32.mxu0 0.0
    %919 = vmatmul.mubr.f32.gmra.mrb[0].mxu0 %v839
    %v920 = vpop.f32.mrb[0].mxu0
    %v921 = vadd.f32 %v830, %v920
    %v922 = vpop.f32.mrb[0].mxu0
    %923 = vmatprep.mubr.f32.mxu0 0.0
    %924 = vmatmul.mubr.f32.gmra.mrb[0].mxu0 %v842
    %v925 = vpop.f32.mrb[0].mxu0
    %v926 = vadd.f32 %v830, %v925
    %v927 = vpop.f32.mrb[0].mxu0
    %928 = vdwg.mxu0
    %929 = vst [vmem:[#allocation2] sm:$0xff] %v911
    %930 = vst [vmem:[#allocation2 + $0x8] sm:$0xff] %v916
    %931 = vst [vmem:[#allocation2 + $0x10] sm:$0xff] %v921
    %932 = vst [vmem:[#allocation2 + $0x18] sm:$0xff] %v926
    // Predicated region
    $region58: #{tpu_custom_call.1} parent=1 // pred_check
      _
    $region59: #{tpu_custom_call.1} parent=1 // pred_check_branch
      %934 = sbr.rel (0) target = $region61
    $region60: #{tpu_custom_call.1} parent=1 // pred_region
      %s936 = ssub.s32 512, 512
      %937 = vsyncadd [#allocation3], %s936
      %s938 = sshll.u32 [#allocation2], 4
      %s939 = int_to_ptr.vmem [resolvable:$true] %s938
      %944 = dma.vmem_to_hbm [thread:$0]  %s939, 512, %s14, [#allocation3], 128, 128, 8
    $region61: #{tpu_custom_call.1} parent=1 // pred_fallthru
      _
    // Predicated region
    $region62: #{tpu_custom_call.1} parent=1 // pred_check
      _
    $region63: #{tpu_custom_call.1} parent=1 // pred_check_branch
      %946 = sbr.rel (0) target = $region65
    $region64: #{tpu_custom_call.1} parent=1 // pred_region
      %947 = dma.done [#allocation3], 512
    $region65: #{tpu_custom_call.1} parent=1 // pred_fallthru
      _
    %948 = vsyncpa [#allocation3], 1

</llo_original>
